<compile_context>
chip_gen: v6e
topology: v6e:2x2x1
jax: 0.10.0
libtpu: 0.0.40
codegen_flags: <defaults>
</compile_context>

<pallas_src>
import jax
import jax.numpy as jnp
from jax.experimental import pallas as pl
from jax.experimental.pallas import tpu as pltpu

H1 = 1024   # first MLP width  (nn.Linear(hidden_size, 1024))
H2 = 512    # second MLP width (nn.Linear(1024, 512))


# ---------------------------------------------------------------------------
# Kernel 1: streaming mean-pool over the sequence axis (HBM-bound).
# ---------------------------------------------------------------------------

def _make_pool_kernel(s_total, seq_tile, n_seq_tiles):
    inv_s = 1.0 / float(s_total)
    rem = s_total - (n_seq_tiles - 1) * seq_tile   # valid rows in the last tile

    def kernel(h_ref, o_ref):
        s = pl.program_id(1)

        @pl.when(s == 0)
        def _init():
            o_ref[...] = jnp.zeros_like(o_ref)

        if rem == seq_tile:
            # Every tile is full: single unmasked accumulate in the hot loop.
            o_ref[...] += jnp.sum(h_ref[...], axis=1, dtype=jnp.float32)
        else:
            @pl.when(s != n_seq_tiles - 1)
            def _acc_full():
                o_ref[...] += jnp.sum(h_ref[...], axis=1, dtype=jnp.float32)

            @pl.when(s == n_seq_tiles - 1)
            def _acc_partial():
                # Static slice: never reads the padded rows of the last tile
                # and adds zero iota/where/select work to the full tiles.
                o_ref[...] += jnp.sum(h_ref[:, :rem, :], axis=1,
                                      dtype=jnp.float32)

        @pl.when(s == n_seq_tiles - 1)
        def _scale():
            o_ref[...] = o_ref[...] * inv_s

    return kernel


def _pick_batch_tile(B):
    # Multiple of 16 (bf16 sublane packing); prefer >= 2 batch tiles so the
    # "parallel" axis can be sharded across v7x's two TensorCores.
    for cand in (128, 64, 32, 16):
        if B % cand == 0 and B > cand:
            return cand
    return B


def mean_pool(hidden_states, *, batch_tile=None, seq_tile=None,
              per_buffer_budget_bytes=8 * 2**20):
    """hidden_states [B, S, H] bf16 -> pooled [B, H] f32 (mean over seq)."""
    B, S, H = hidden_states.shape

    TB = int(batch_tile) if batch_tile is not None else _pick_batch_tile(B)
    assert TB == B or B % TB == 0, "batch tile must divide B"

    if seq_tile is not None:
        TS = int(seq_tile)
    else:
        budget_rows = per_buffer_budget_bytes // max(1, TB * H * 2)
        TS = min(S, (budget_rows // 16) * 16)
        if TS <= 0 or TS >= S:
            TS = S
    assert TS == S or TS % 16 == 0, "seq tile must be a multiple of 16 or S"

    n_b = pl.cdiv(B, TB)
    n_s = pl.cdiv(S, TS)

    kernel = _make_pool_kernel(S, TS, n_s)

    # Advisory cost: memory-bound on streaming hidden_states.
    cost = pl.CostEstimate(flops=B * S * H, transcendentals=0,
                           bytes_accessed=2 * B * S * H + 4 * B * H)

    # VMEM: double-buffered hidden tile + f32 output block (x2 for safety).
    est = 2 * TB * TS * H * 2 + 2 * TB * H * 4
    vmem_limit = int(min(56 * 2**20, max(32 * 2**20, int(est * 1.4))))

    return pl.pallas_call(
        kernel,
        out_shape=jax.ShapeDtypeStruct((B, H), jnp.float32),
        grid=(n_b, n_s),
        in_specs=[pl.BlockSpec((TB, TS, H), lambda i, s: (i, s, 0))],
        out_specs=pl.BlockSpec((TB, H), lambda i, s: (i, 0)),
        compiler_params=pltpu.CompilerParams(
            dimension_semantics=("parallel", "arbitrary"),
            vmem_limit_bytes=vmem_limit),
        cost_estimate=cost,
    )(hidden_states)


# ---------------------------------------------------------------------------
# Kernel 2: bf16 MLP head over the pooled representation (eval mode).
# ---------------------------------------------------------------------------

def _mlp_kernel(p_ref, w1_ref, b1_ref, w2_ref, b2_ref, w3_ref, b3_ref, o_ref):
    pooled = p_ref[...].astype(jnp.bfloat16)                          # [TM, H]

    # Linear(H, 1024) + ReLU   (Dropout -> identity in eval)
    y1 = jnp.dot(pooled, w1_ref[...], preferred_element_type=jnp.float32)
    a1 = jnp.maximum(y1 + b1_ref[...].astype(jnp.float32),
                     0.0).astype(jnp.bfloat16)

    # Linear(1024, 512) + ReLU
    y2 = jnp.dot(a1, w2_ref[...], preferred_element_type=jnp.float32)
    a2 = jnp.maximum(y2 + b2_ref[...].astype(jnp.float32),
                     0.0).astype(jnp.bfloat16)

    # Linear(512, 1): contract w3_row [1,512] with a2 [TM,512] on their last
    # dims -> lane-dense [1, TM] logits row (unmasked store).
    y3 = jax.lax.dot_general(w3_ref[...], a2,
                             dimension_numbers=(((1,), (1,)), ((), ())),
                             preferred_element_type=jnp.float32)      # [1, TM]
    o_ref[...] = (y3 + b3_ref[0, 0]).astype(jnp.bfloat16)


def _pick_mlp_tile(B):
    if B <= 256:
        return B
    for cand in (256, 128, 64, 32, 16, 8):
        if B % cand == 0:
            return cand
    return B


def mlp_head(pooled, w1, b1, w2, b2, w3, b3, *, row_tile=None):
    """pooled [B, H] f32 -> logits [B, 1] bf16."""
    B, H = pooled.shape
    TM = int(row_tile) if row_tile is not None else _pick_mlp_tile(B)
    assert B % TM == 0
    n_m = B // TM

    # Layout plumbing: w3 [512,1] -> lane-dense row [1,512]; b3 -> f32 scalar.
    w3_row = w3.reshape(1, H2)
    b3_smem = b3.astype(jnp.float32).reshape(1, 1)

    cost = pl.CostEstimate(
        flops=2 * B * (H * H1 + H1 * H2 + H2), transcendentals=0,
        bytes_accessed=4 * B * H + 2 * (H * H1 + H1 * H2 + H1 + 2 * H2) + 2 * B)

    est = (2 * TM * H * 4                                  # pooled tile (x2)
           + 2 * (H * H1 + H1 * H2 + H1 + 2 * H2) * 2      # weights + biases
           + TM * (H1 + H2) * 4)                           # activations
    vmem_limit = int(min(56 * 2**20, max(32 * 2**20, int(est * 1.4))))

    out = pl.pallas_call(
        _mlp_kernel,
        out_shape=jax.ShapeDtypeStruct((n_m, TM), jnp.bfloat16),
        grid=(n_m,),
        in_specs=[
            pl.BlockSpec((TM, H), lambda i: (i, 0)),            # pooled rows
            pl.BlockSpec((H, H1), lambda i: (0, 0)),            # w1
            pl.BlockSpec((1, H1), lambda i: (0, 0)),            # b1
            pl.BlockSpec((H1, H2), lambda i: (0, 0)),           # w2
            pl.BlockSpec((1, H2), lambda i: (0, 0)),            # b2
            pl.BlockSpec((1, H2), lambda i: (0, 0)),            # w3 as a row
            pl.BlockSpec(memory_space=pltpu.MemorySpace.SMEM),  # b3 scalar
        ],
        out_specs=pl.BlockSpec((1, TM), lambda i: (i, 0)),      # lane-dense
        compiler_params=pltpu.CompilerParams(
            dimension_semantics=("parallel",),
            vmem_limit_bytes=vmem_limit),
        cost_estimate=cost,
    )(pooled, w1, b1, w2, b2, w3_row, b3_smem)

    return out.reshape(B, 1)


# ---------------------------------------------------------------------------
# Full head: mean-pool + MLP (matches ModelWithLoraRegressor.forward tail).
# ---------------------------------------------------------------------------

def lora_regressor_head(hidden_states, w1, b1, w2, b2, w3, b3, *,
                        batch_tile=None, seq_tile=None,
                        per_buffer_budget_bytes=8 * 2**20):
    """hidden_states: [B, S, H] bf16; weights [in,out] bf16; biases [1,out] bf16.

    Returns logits [B, 1] bf16, matching the PyTorch forward (eval mode).
    """
    B, S, H = hidden_states.shape
    assert w1.shape == (H, H1) and w2.shape == (H1, H2) and w3.shape == (H2, 1)
    assert b1.shape == (1, H1) and b2.shape == (1, H2) and b3.shape == (1, 1)

    pooled = mean_pool(hidden_states, batch_tile=batch_tile, seq_tile=seq_tile,
                       per_buffer_budget_bytes=per_buffer_budget_bytes)
    return mlp_head(pooled, w1, b1, w2, b2, w3, b3)


# ---------------------------------------------------------------------------
# Deterministic synthetic parameters and pure-JAX reference.
# ---------------------------------------------------------------------------

def _init_params(key, hidden_size):
    ks = jax.random.split(key, 6)

    def lin(kw, kb, fan_in, fan_out):
        bound = 1.0 / jnp.sqrt(fan_in)
        w = jax.random.uniform(kw, (fan_in, fan_out), jnp.float32, -bound, bound)
        b = jax.random.uniform(kb, (1, fan_out), jnp.float32, -bound, bound)
        return w.astype(jnp.bfloat16), b.astype(jnp.bfloat16)

    w1, b1 = lin(ks[0], ks[1], hidden_size, H1)
    w2, b2 = lin(ks[2], ks[3], H1, H2)
    w3, b3 = lin(ks[4], ks[5], H2, 1)
    return w1, b1, w2, b2, w3, b3


def _reference(h, w1, b1, w2, b2, w3, b3):
    pooled = jnp.mean(h.astype(jnp.float32), axis=1).astype(jnp.bfloat16)
    a1 = jnp.maximum(
        jnp.dot(pooled, w1, preferred_element_type=jnp.float32)
        + b1.astype(jnp.float32), 0.0).astype(jnp.bfloat16)
    a2 = jnp.maximum(
        jnp.dot(a1, w2, preferred_element_type=jnp.float32)
        + b2.astype(jnp.float32), 0.0).astype(jnp.bfloat16)
    return (jnp.dot(a2, w3, preferred_element_type=jnp.float32)
            + b3.astype(jnp.float32)).astype(jnp.bfloat16)


if __name__ == "__main__":
    key = jax.random.PRNGKey(0)
    k_h, k_p, k_h2 = jax.random.split(key, 3)

    # ---- test 1: small config, single grid step ------------------------------
    B, S, H = 2, 8, 32
    hidden_states = jax.random.normal(k_h, (B, S, H), jnp.float32).astype(jnp.bfloat16)
    w1, b1, w2, b2, w3, b3 = _init_params(k_p, H)

    logits = lora_regressor_head(hidden_states, w1, b1, w2, b2, w3, b3)
    logits = jax.block_until_ready(logits)
    ref = _reference(hidden_states, w1, b1, w2, b2, w3, b3)
    assert logits.shape == (B, 1) and logits.dtype == jnp.bfloat16
    assert jnp.allclose(logits.astype(jnp.float32), ref.astype(jnp.float32),
                        atol=2e-2, rtol=2e-2)

    # ---- test 2: tiled seq reduction with a partial last tile (S % TS != 0) --
    S2 = 40
    hidden_states2 = jax.random.normal(k_h2, (B, S2, H), jnp.float32).astype(jnp.bfloat16)
    logits2 = lora_regressor_head(hidden_states2, w1, b1, w2, b2, w3, b3,
                                  seq_tile=16)
    logits2 = jax.block_until_ready(logits2)
    ref2 = _reference(hidden_states2, w1, b1, w2, b2, w3, b3)
    assert jnp.allclose(logits2.astype(jnp.float32), ref2.astype(jnp.float32),
                        atol=2e-2, rtol=2e-2)

    print("KERNEL_OK")
</pallas_src>

<mosaic_0001>
module attributes {stable_mosaic.version = 11 : i64} {
  func.func @kernel(%arg0: i32, %arg1: i32, %arg2: memref<2x8x32xbf16, #tpu.memory_space<vmem>>, %arg3: memref<2x32xf32, #tpu.memory_space<vmem>>) attributes {dimension_semantics = [#tpu.dimension_semantics<parallel>, #tpu.dimension_semantics<arbitrary>], iteration_bounds = array<i64: 1, 1>, scalar_prefetch = 0 : i64, scratch_operands = 0 : i64, tpu.core_type = #tpu.core_type<tc>, window_params = [{transform_indices = @transform_0, window_bounds = array<i64: 2, 8, 32>}, {transform_indices = @transform_1, window_bounds = array<i64: 2, 32>}]} {
    %c0_i32 = arith.constant 0 : i32
    %0 = arith.cmpi eq, %arg1, %c0_i32 : i32
    %1 = arith.extui %0 : i1 to i32
    %c0_i32_0 = arith.constant 0 : i32
    %2 = arith.cmpi ne, %1, %c0_i32_0 : i32
    scf.if %2 {
      %cst_9 = arith.constant 0.000000e+00 : f32
      %12 = vector.broadcast %cst_9 : f32 to vector<2x32xf32>
      %c0_10 = arith.constant 0 : index
      %c0_11 = arith.constant 0 : index
      %13 = vector.load %arg3[%c0_10, %c0_11] : memref<2x32xf32, #tpu.memory_space<vmem>>, vector<2x32xf32>
      tpu.vector_store %arg3[%c0_10, %c0_11], %12 {strides = array<i32>} : memref<2x32xf32, #tpu.memory_space<vmem>>, vector<2x32xf32>,
    } else {
    }
    %c0 = arith.constant 0 : index
    %c0_1 = arith.constant 0 : index
    %3 = vector.load %arg3[%c0, %c0_1] : memref<2x32xf32, #tpu.memory_space<vmem>>, vector<2x32xf32>
    %c0_2 = arith.constant 0 : index
    %c0_3 = arith.constant 0 : index
    %c0_4 = arith.constant 0 : index
    %4 = vector.load %arg2[%c0_2, %c0_3, %c0_4] : memref<2x8x32xbf16, #tpu.memory_space<vmem>>, vector<2x8x32xbf16>
    %5 = arith.extf %4 : vector<2x8x32xbf16> to vector<2x8x32xf32>
    %cst = arith.constant dense<0.000000e+00> : vector<2x32xf32>
    %6 = vector.multi_reduction <add>, %5, %cst [1] : vector<2x8x32xf32> to vector<2x32xf32>
    %7 = arith.addf %3, %6 : vector<2x32xf32>
    %c0_5 = arith.constant 0 : index
    %c0_6 = arith.constant 0 : index
    %8 = vector.load %arg3[%c0_5, %c0_6] : memref<2x32xf32, #tpu.memory_space<vmem>>, vector<2x32xf32>
    tpu.vector_store %arg3[%c0_5, %c0_6], %7 {strides = array<i32>} : memref<2x32xf32, #tpu.memory_space<vmem>>, vector<2x32xf32>,
    %c0_i32_7 = arith.constant 0 : i32
    %9 = arith.cmpi eq, %arg1, %c0_i32_7 : i32
    %10 = arith.extui %9 : i1 to i32
    %c0_i32_8 = arith.constant 0 : i32
    %11 = arith.cmpi ne, %10, %c0_i32_8 : i32
    scf.if %11 {
      %c0_9 = arith.constant 0 : index
      %c0_10 = arith.constant 0 : index
      %12 = vector.load %arg3[%c0_9, %c0_10] : memref<2x32xf32, #tpu.memory_space<vmem>>, vector<2x32xf32>
      %cst_11 = arith.constant 1.250000e-01 : f32
      %13 = vector.broadcast %cst_11 : f32 to vector<2x32xf32>
      %14 = arith.mulf %12, %13 : vector<2x32xf32>
      %c0_12 = arith.constant 0 : index
      %c0_13 = arith.constant 0 : index
      %15 = vector.load %arg3[%c0_12, %c0_13] : memref<2x32xf32, #tpu.memory_space<vmem>>, vector<2x32xf32>
      tpu.vector_store %arg3[%c0_12, %c0_13], %14 {strides = array<i32>} : memref<2x32xf32, #tpu.memory_space<vmem>>, vector<2x32xf32>,
    } else {
    }
    return
  }
  func.func @transform_0(%arg0: i32, %arg1: i32) -> (i32, i32, i32) {
    %c0_i32 = arith.constant 0 : i32
    %c0_i32_0 = arith.constant 0 : i32
    return %arg0, %arg1, %c0_i32 : i32, i32, i32
  }
  func.func @transform_1(%arg0: i32, %arg1: i32) -> (i32, i32) {
    %c0_i32 = arith.constant 0 : i32
    %c0_i32_0 = arith.constant 0 : i32
    return %arg0, %c0_i32 : i32, i32
  }
}

</mosaic_0001>

<llo_original>
// kernel: tpu_custom_call.1
$region0: #{tpu_custom_call.1}
  #allocation0 [shape = 'u32[]', space=smem, size = 0x4, offset = 0x4, fixed_abs, tag = 'smem constant byte address 0x4 - core index']
  #allocation1 [shape = 'u32[144,128]{1,0:T(1,128)}', space=vmem, size = 0x12000, scoped, tag = 'internal scratch']
  %s0 = inlined_call_operand.hbm [shape: bf16[2,8,32], index: 0, kind: input, shape index: {}]
  %s1 = inlined_call_operand.hbm [shape: f32[2,32], index: 1, kind: output, shape index: {}]
  %s2 = sld [smem:[#allocation0]]
  $region26: #{tpu_custom_call.1} parent=0
    _
  %s4 = ssub.s32 1, %s2
  %s5 = scalar_select 0, %s4, %s2
  $region1: #{tpu_custom_call.1} parent=0
    #allocation2 [shape = 'u8[4096]{0}', space=vmem, size = 0x1000, scoped, tag = 'input window, operand 0, single buffered']
    #allocation3 [shape = 's32[1]{0}', space=sflag, size = 0x4, scoped, tag = 'scoped memory for tpu_custom_call.1']
    #allocation4 [shape = 's32[1]{0}', space=sflag, size = 0x4, scoped, tag = 'scoped memory for tpu_custom_call.1']
    #allocation5 [shape = 'u8[1024]{0}', space=vmem, size = 0x400, scoped, tag = 'output window, operand 0, single buffered']
    %6 = vsyncpa [#allocation3], 0
    %7 = vsyncpa [#allocation4], 0
    // Predicated region
    $region2: #{tpu_custom_call.1} parent=1 // pred_check
      _
    $region3: #{tpu_custom_call.1} parent=1 // pred_check_branch
      %9 = sbr.rel (0) target = $region5
    $region4: #{tpu_custom_call.1} parent=1 // pred_region
      %s11 = ssub.s32 128, 128
      %12 = vsyncadd [#allocation3], %s11
      %s13 = sshll.u32 [#allocation2], 4
      %s14 = int_to_ptr.vmem [resolvable:$true] %s13
      %19 = dma.hbm_to_vmem [thread:$0]  %s0, 128, %s14, [#allocation3], 64, 64, 4
    $region5: #{tpu_custom_call.1} parent=1 // pred_fallthru
      _
    // Predicated region
    $region6: #{tpu_custom_call.1} parent=1 // pred_check
      _
    $region7: #{tpu_custom_call.1} parent=1 // pred_check_branch
      %21 = sbr.rel (0) target = $region9
    $region8: #{tpu_custom_call.1} parent=1 // pred_region
      %22 = dma.done [#allocation3], 128
    $region9: #{tpu_custom_call.1} parent=1 // pred_fallthru
      _
    %p23 = scmp.eq.s32.totalorder 0, 0
    // Predicated region
    $region10: #{tpu_custom_call.1} parent=1 // pred_check
      %p24 = pneg %p23
    $region11: #{tpu_custom_call.1} parent=1 // pred_check_branch
      %26 = sbr.rel (%p24) target = $region13
    $region12: #{tpu_custom_call.1} parent=1 // pred_region
      %vm27 = vcmask 254976
      %28 = vst.msk [vmem:[#allocation5] sm:$0x3] %vm27, 0.0
    $region13: #{tpu_custom_call.1} parent=1 // pred_fallthru
      _
    %v29 = vld [vmem:[#allocation5] sm:$0x3]
    %v30 = vld [vmem:[#allocation2] sm:$0xf]
    %v31 = vld [vmem:[#allocation2 + $0x4] sm:$0xf]
    %v32 = vunpack.c.l.bf16 %v30
    %v33 = vunpack.c.l.bf16 %v31
    %vm34 = vcmask 261120
    %v35 = vsel %vm34, %v32, 0.0
    %v36 = vrot.slane %v35, 4
    %v37 = vadd.f32 %v35, %v36
    %v38 = vrot.slane %v37, 2
    %v39 = vadd.f32 %v37, %v38
    %v40 = vrot.slane %v39, 1
    %v41 = vadd.f32 %v39, %v40
    %v42 = vsel %vm34, %v33, 0.0
    %v43 = vrot.slane %v42, 4
    %v44 = vadd.f32 %v42, %v43
    %v45 = vrot.slane %v44, 2
    %v46 = vadd.f32 %v44, %v45
    %v47 = vrot.slane %v46, 1
    %v48 = vadd.f32 %v46, %v47
    %vm51 = vcmask 1041409
    %v52 = vsel %vm51, %v48, %v41
    %v54 = vadd.f32 %v29, %v52
    %vm55 = vcmask 254976
    %56 = vst.msk [vmem:[#allocation5] sm:$0x3] %vm55, %v54
    // Predicated region
    $region14: #{tpu_custom_call.1} parent=1 // pred_check
      %p57 = pneg %p23
    $region15: #{tpu_custom_call.1} parent=1 // pred_check_branch
      %59 = sbr.rel (%p57) target = $region17
    $region16: #{tpu_custom_call.1} parent=1 // pred_region
      %v60 = vld [vmem:[#allocation5] sm:$0x3]
      %v61 = vmul.f32 %v60, 0.125
      %62 = vst.msk [vmem:[#allocation5] sm:$0x3] %vm55, %v61
    $region17: #{tpu_custom_call.1} parent=1 // pred_fallthru
      _
    // Predicated region
    $region18: #{tpu_custom_call.1} parent=1 // pred_check
      _
    $region19: #{tpu_custom_call.1} parent=1 // pred_check_branch
      %64 = sbr.rel (0) target = $region21
    $region20: #{tpu_custom_call.1} parent=1 // pred_region
      %s66 = ssub.s32 32, 32
      %67 = vsyncadd [#allocation4], %s66
      %s69 = sshll.u32 [#allocation5], 4
      %s70 = int_to_ptr.vmem [resolvable:$true] %s69
      %72 = dma.vmem_to_hbm [thread:$0]  %s70, 32, %s1, [#allocation4]
    $region21: #{tpu_custom_call.1} parent=1 // pred_fallthru
      _
    // Predicated region
    $region22: #{tpu_custom_call.1} parent=1 // pred_check
      _
    $region23: #{tpu_custom_call.1} parent=1 // pred_check_branch
      %74 = sbr.rel (0) target = $region25
    $region24: #{tpu_custom_call.1} parent=1 // pred_region
      %75 = dma.done [#allocation4], 32
    $region25: #{tpu_custom_call.1} parent=1 // pred_fallthru
      _
    %76 = vsyncpa [#allocation3], 1
    %77 = vsyncpa [#allocation4], 1

</llo_original>
